<compile_context>
chip_gen: v6e
topology: v6e:2x2x1
jax: 0.10.0
libtpu: 0.0.40
codegen_flags: <defaults>
</compile_context>

<pallas_src>
import functools

import jax
import jax.numpy as jnp
from jax import lax
from jax.experimental import pallas as pl
from jax.experimental.pallas import tpu as pltpu

_MASK_VALUE = -1e30   # finite "-inf": exp() underflows to exactly 0, no NaN risk
_NUM_LANES = 128      # vreg lane width


def _vmem_limit_bytes():
    """Per-generation scoped-VMEM cap (v7x has 64 MiB/TC vs 128 MiB on v5e/v6e)."""
    try:
        cap = int(pltpu.get_tpu_info().vmem_capacity_bytes)
        if cap > 0:
            return min(max(cap * 3 // 4, 32 * 1024 * 1024), 128 * 1024 * 1024)
    except Exception:
        pass
    return 64 * 1024 * 1024


def _bcast_minor(x, width):
    """x: (..., _NUM_LANES) lane-replicated value -> (..., width)."""
    if width == _NUM_LANES:
        return x
    if width % _NUM_LANES == 0:
        reps = (1,) * (x.ndim - 1) + (width // _NUM_LANES,)
        return jnp.tile(x, reps)
    return jnp.broadcast_to(x[..., :1], x.shape[:-1] + (width,))


def _qkv_proj_kernel(x_ref, w_ref, q_ref, k_ref, v_ref, *,
                     num_heads, head_dim, compute_dtype):
    """Fused QKV projection with head-major outputs.

    x_ref: (1, tt, D_in) input dtype; w_ref: (D_in, 3*D_out) compute dtype (resident);
    q_ref/k_ref/v_ref: (1, H, tt, hd) compute dtype.
    """
    x = x_ref[0].astype(compute_dtype)
    w = w_ref[...]
    # One full-width MXU matmul, f32 accumulation.
    qkv = jnp.dot(x, w, preferred_element_type=jnp.float32)      # (tt, 3*H*hd)
    d_out = num_heads * head_dim
    # Static per-head lane slices -> head-major writes (no XLA transpose round trip).
    for h in range(num_heads):
        lo = h * head_dim
        hi = lo + head_dim
        q_ref[0, h] = qkv[:, lo:hi].astype(q_ref.dtype)
        k_ref[0, h] = qkv[:, d_out + lo:d_out + hi].astype(k_ref.dtype)
        v_ref[0, h] = qkv[:, 2 * d_out + lo:2 * d_out + hi].astype(v_ref.dtype)


def _flash_mha_kernel(q_ref, k_ref, v_ref, wo_ref, bo_ref, o_ref,
                      m_sc, l_sc, acc_sc, ctx_sc, *,
                      tq, tk, num_heads, head_dim, compute_dtype):
    """Online-softmax causal attention + fused output projection.

    q_ref: (1, H, tq, hd)   k_ref/v_ref: (1, H, tk, hd)   (compute dtype)
    wo_ref: (D_out, D_out) compute dtype (resident)   bo_ref: (1, D_out) f32
    o_ref: (1, tq, D_out)
    scratch: m_sc/l_sc: (H, tq, 128) f32 (lane-replicated), acc_sc: (H, tq, hd) f32,
             ctx_sc: (tq, D_out) f32.
    """
    qi = pl.program_id(1)
    ki = pl.program_id(2)

    @pl.when(ki == 0)
    def _init():
        m_sc[...] = jnp.full(m_sc.shape, _MASK_VALUE, jnp.float32)
        l_sc[...] = jnp.zeros(l_sc.shape, jnp.float32)
        acc_sc[...] = jnp.zeros(acc_sc.shape, jnp.float32)

    first_row = qi * tq
    last_row = first_row + (tq - 1)
    first_col = ki * tk
    last_col = first_col + (tk - 1)

    # Causal tile skip: this KV tile contributes iff its first column <= last query row.
    @pl.when(first_col <= last_row)
    def _compute():
        # Softmax scale is already folded into the Q projection weights.
        q = q_ref[0]
        k = k_ref[0]
        v = v_ref[0]
        s = jnp.einsum('hqd,hkd->hqk', q, k,
                       preferred_element_type=jnp.float32)       # (H, tq, tk) f32

        def _update(s_val):
            m_prev = m_sc[...]                                   # (H, tq, 128)
            l_prev = l_sc[...]
            m_cur = jnp.max(s_val, axis=-1, keepdims=True)       # (H, tq, 1)
            m_new = jnp.maximum(m_prev, m_cur)                   # (H, tq, 128)
            alpha = jnp.exp(m_prev - m_new)                      # (H, tq, 128)
            p = jnp.exp(s_val - _bcast_minor(m_new, tk))         # (H, tq, tk)
            l_sc[...] = alpha * l_prev + jnp.sum(p, axis=-1, keepdims=True)
            acc_sc[...] = _bcast_minor(alpha, head_dim) * acc_sc[...] + jnp.einsum(
                'hqk,hkd->hqd', p.astype(compute_dtype), v,
                preferred_element_type=jnp.float32)
            m_sc[...] = m_new

        needs_mask = last_col > first_row   # tile straddles the causal diagonal

        @pl.when(needs_mask)
        def _masked():
            rows = first_row + lax.broadcasted_iota(jnp.int32, (tq, tk), 0)
            cols = first_col + lax.broadcasted_iota(jnp.int32, (tq, tk), 1)
            _update(jnp.where((cols > rows)[None, :, :], _MASK_VALUE, s))

        @pl.when(jnp.logical_not(needs_mask))
        def _unmasked():                    # fully-unmasked tile: skip the mask math
            _update(s)

    @pl.when(ki == pl.num_programs(2) - 1)
    def _finalize():
        # dropout(p=0.0) on the attention weights is the identity -> nothing to do.
        inv_l = pl.reciprocal(l_sc[...], approx=True)            # (H, tq, 128), EUP
        ctx = acc_sc[...] * _bcast_minor(inv_l, head_dim)        # (H, tq, hd) f32
        # Pack heads into a lane-dense (tq, D_out) slab (static lane slices, once per
        # q-tile), then a single full-K MXU matmul for the output projection.
        for h in range(num_heads):
            ctx_sc[:, h * head_dim:(h + 1) * head_dim] = ctx[h]
        out = jnp.dot(ctx_sc[...].astype(compute_dtype), wo_ref[...],
                      preferred_element_type=jnp.float32) + bo_ref[...]
        o_ref[0] = out.astype(o_ref.dtype)


def multi_head_attention(x, w_qkv, w_o, b_o, *, num_heads,
                         block_t=256, block_q=256, block_k=256,
                         compute_dtype=jnp.bfloat16):
    """x: (B, T, D_in); w_qkv: (D_in, 3*D_out) = [Wq|Wk|Wv]; w_o: (D_out, D_out); b_o: (D_out,)."""
    B, T, D_in = x.shape
    D3 = w_qkv.shape[1]
    D_out = D3 // 3
    assert D3 == 3 * D_out
    assert D_out % num_heads == 0, "d_out must be divisible by num_heads"
    hd = D_out // num_heads
    scale = 1.0 / float(hd) ** 0.5

    tt = min(block_t, T)
    tq = min(block_q, T)
    tk = min(block_k, T)
    assert T % tt == 0 and T % tq == 0 and T % tk == 0

    # Fold the softmax scale into the Q columns (free at trace time), cast weights once.
    w_qkv_s = jnp.concatenate([w_qkv[:, :D_out] * scale, w_qkv[:, D_out:]], axis=1)
    w_qkv_c = w_qkv_s.astype(compute_dtype)
    w_o_c = w_o.astype(compute_dtype)
    b_o_2d = b_o.reshape(1, D_out).astype(jnp.float32)

    vmem_limit = _vmem_limit_bytes()

    def cparams(sem):
        return pltpu.CompilerParams(dimension_semantics=sem,
                                    vmem_limit_bytes=vmem_limit)

    # ---- Kernel 1: fused QKV projection, head-major bf16 outputs ----------------
    qkv_kernel = functools.partial(_qkv_proj_kernel, num_heads=num_heads,
                                   head_dim=hd, compute_dtype=compute_dtype)
    head_shape = jax.ShapeDtypeStruct((B, num_heads, T, hd), compute_dtype)
    qh, kh, vh = pl.pallas_call(
        qkv_kernel,
        out_shape=(head_shape, head_shape, head_shape),
        grid=(B, T // tt),
        in_specs=[
            pl.BlockSpec((1, tt, D_in), lambda b, t: (b, t, 0)),
            pl.BlockSpec(memory_space=pltpu.MemorySpace.VMEM),   # resident fused weight
        ],
        out_specs=(
            pl.BlockSpec((1, num_heads, tt, hd), lambda b, t: (b, 0, t, 0)),
            pl.BlockSpec((1, num_heads, tt, hd), lambda b, t: (b, 0, t, 0)),
            pl.BlockSpec((1, num_heads, tt, hd), lambda b, t: (b, 0, t, 0)),
        ),
        compiler_params=cparams(("parallel", "parallel")),
    )(x, w_qkv_c)

    # Last KV tile the causal mask allows for query tile i: DMA is clamped to it so
    # fully-masked KV tiles cost neither compute nor HBM traffic.
    def kv_last(i):
        return (i * tq + tq - 1) // tk

    # ---- Kernel 2: flash attention + fused output projection --------------------
    mha_kernel = functools.partial(_flash_mha_kernel, tq=tq, tk=tk,
                                   num_heads=num_heads, head_dim=hd,
                                   compute_dtype=compute_dtype)
    out = pl.pallas_call(
        mha_kernel,
        out_shape=jax.ShapeDtypeStruct((B, T, D_out), x.dtype),
        grid=(B, T // tq, T // tk),
        in_specs=[
            pl.BlockSpec((1, num_heads, tq, hd), lambda b, i, j: (b, 0, i, 0)),
            pl.BlockSpec((1, num_heads, tk, hd),
                         lambda b, i, j: (b, 0, jnp.minimum(j, kv_last(i)), 0)),
            pl.BlockSpec((1, num_heads, tk, hd),
                         lambda b, i, j: (b, 0, jnp.minimum(j, kv_last(i)), 0)),
            pl.BlockSpec(memory_space=pltpu.MemorySpace.VMEM),   # resident W_out
            pl.BlockSpec(memory_space=pltpu.MemorySpace.VMEM),   # resident bias
        ],
        out_specs=pl.BlockSpec((1, tq, D_out), lambda b, i, j: (b, i, 0)),
        scratch_shapes=[
            pltpu.VMEM((num_heads, tq, _NUM_LANES), jnp.float32),  # m (running max)
            pltpu.VMEM((num_heads, tq, _NUM_LANES), jnp.float32),  # l (running denom)
            pltpu.VMEM((num_heads, tq, hd), jnp.float32),          # acc (numerator)
            pltpu.VMEM((tq, D_out), jnp.float32),                  # packed ctx slab
        ],
        compiler_params=cparams(("parallel", "parallel", "arbitrary")),
    )(qh, kh, vh, w_o_c, b_o_2d)
    return out


def _reference(x, wq, wk, wv, wo, bo, num_heads):
    """Pure-JAX f32 reference mirroring the torch MultiHeadAttention forward pass."""
    B, T, _ = x.shape
    D_out = wq.shape[1]
    hd = D_out // num_heads
    q = (x @ wq).reshape(B, T, num_heads, hd).transpose(0, 2, 1, 3)
    k = (x @ wk).reshape(B, T, num_heads, hd).transpose(0, 2, 1, 3)
    v = (x @ wv).reshape(B, T, num_heads, hd).transpose(0, 2, 1, 3)
    s = jnp.einsum("bhqd,bhkd->bhqk", q, k)
    mask = jnp.triu(jnp.ones((T, T), bool), k=1)
    s = jnp.where(mask[None, None], -jnp.inf, s)
    w = jax.nn.softmax(s / (hd ** 0.5), axis=-1)
    ctx = jnp.einsum("bhqk,bhkd->bhqd", w, v).transpose(0, 2, 1, 3).reshape(B, T, D_out)
    return ctx @ wo + bo


if __name__ == "__main__":
    # Demo config from the torch script: d_in=3, d_out=2, context_length=6,
    # num_heads=2, dropout=0.0, qkv_bias=False.
    D_IN, D_OUT, NUM_HEADS = 3, 2, 2

    inputs = jnp.array(
        [[0.43, 0.15, 0.89],
         [0.55, 0.87, 0.66],
         [0.57, 0.85, 0.64],
         [0.22, 0.58, 0.33],
         [0.77, 0.25, 0.10],
         [0.05, 0.80, 0.55]], dtype=jnp.float32)
    batch = jnp.stack((inputs, inputs), axis=0)            # (2, 6, 3)

    key = jax.random.PRNGKey(0)
    k1, k2, k3, k4, k5 = jax.random.split(key, 5)
    wq = jax.random.uniform(k1, (D_IN, D_OUT), jnp.float32)
    wk = jax.random.uniform(k2, (D_IN, D_OUT), jnp.float32)
    wv = jax.random.uniform(k3, (D_IN, D_OUT), jnp.float32)
    wo = jax.random.uniform(k4, (D_OUT, D_OUT), jnp.float32, minval=-0.5, maxval=0.5)
    bo = jax.random.uniform(k5, (D_OUT,), jnp.float32, minval=-0.5, maxval=0.5)
    w_qkv = jnp.concatenate([wq, wk, wv], axis=1)          # fused (D_in, 3*D_out)

    # Test 1: module config, default bf16 MXU operands (f32 accumulation).
    out = multi_head_attention(batch, w_qkv, wo, bo, num_heads=NUM_HEADS)
    out = jax.block_until_ready(out)
    ref = _reference(batch, wq, wk, wv, wo, bo, NUM_HEADS)
    assert out.shape == (2, 6, D_OUT)
    assert jnp.allclose(out, ref, atol=3e-2, rtol=3e-2), \
        float(jnp.max(jnp.abs(out - ref)))

    # Test 2: tiled flash path (multiple q/kv tiles, causal DMA skip, unmasked
    # fast path, diagonal masked path), bf16 operands.
    B2, T2, D_IN2, D_OUT2, H2 = 2, 128, 16, 8, 2
    ks = jax.random.split(jax.random.PRNGKey(0), 6)
    x2 = jax.random.normal(ks[0], (B2, T2, D_IN2), jnp.float32)
    wq2 = 0.1 * jax.random.normal(ks[1], (D_IN2, D_OUT2), jnp.float32)
    wk2 = 0.1 * jax.random.normal(ks[2], (D_IN2, D_OUT2), jnp.float32)
    wv2 = 0.1 * jax.random.normal(ks[3], (D_IN2, D_OUT2), jnp.float32)
    wo2 = 0.1 * jax.random.normal(ks[4], (D_OUT2, D_OUT2), jnp.float32)
    bo2 = 0.1 * jax.random.normal(ks[5], (D_OUT2,), jnp.float32)
    wqkv2 = jnp.concatenate([wq2, wk2, wv2], axis=1)
    ref2 = _reference(x2, wq2, wk2, wv2, wo2, bo2, H2)

    out2 = multi_head_attention(x2, wqkv2, wo2, bo2, num_heads=H2,
                                block_t=64, block_q=64, block_k=64)
    out2 = jax.block_until_ready(out2)
    assert out2.shape == (B2, T2, D_OUT2)
    assert jnp.allclose(out2, ref2, atol=2e-2, rtol=2e-2), \
        float(jnp.max(jnp.abs(out2 - ref2)))

    # Test 3: same tiled config with f32 MXU operands -> tight check of the
    # online-softmax / fused-projection algorithm itself.
    out3 = multi_head_attention(x2, wqkv2, wo2, bo2, num_heads=H2,
                                block_t=64, block_q=64, block_k=64,
                                compute_dtype=jnp.float32)
    out3 = jax.block_until_ready(out3)
    assert jnp.allclose(out3, ref2, atol=2e-3, rtol=2e-3), \
        float(jnp.max(jnp.abs(out3 - ref2)))

    print("KERNEL_OK")
</pallas_src>

<mosaic_0001>
module attributes {stable_mosaic.version = 11 : i64} {
  func.func @_qkv_proj_kernel(%arg0: i32, %arg1: i32, %arg2: memref<1x6x3xf32, #tpu.memory_space<vmem>>, %arg3: memref<3x6xbf16, #tpu.memory_space<vmem>>, %arg4: memref<1x2x6x1xbf16, #tpu.memory_space<vmem>>, %arg5: memref<1x2x6x1xbf16, #tpu.memory_space<vmem>>, %arg6: memref<1x2x6x1xbf16, #tpu.memory_space<vmem>>) attributes {dimension_semantics = [#tpu.dimension_semantics<parallel>, #tpu.dimension_semantics<parallel>], iteration_bounds = array<i64: 2, 1>, scalar_prefetch = 0 : i64, scratch_operands = 0 : i64, tpu.core_type = #tpu.core_type<tc>, window_params = [{transform_indices = @transform_0, window_bounds = array<i64: 1, 6, 3>}, {pipeline_mode = #tpu.pipeline_mode<synchronous>, transform_indices = @transform_1, window_bounds = array<i64: 3, 6>}, {transform_indices = @transform_2, window_bounds = array<i64: 1, 2, 6, 1>}, {transform_indices = @transform_3, window_bounds = array<i64: 1, 2, 6, 1>}, {transform_indices = @transform_4, window_bounds = array<i64: 1, 2, 6, 1>}]} {
    %c0 = arith.constant 0 : index
    %c0_0 = arith.constant 0 : index
    %c0_1 = arith.constant 0 : index
    %0 = vector.load %arg2[%c0, %c0_0, %c0_1] : memref<1x6x3xf32, #tpu.memory_space<vmem>>, vector<1x6x3xf32>
    %1 = vector.shape_cast %0 : vector<1x6x3xf32> to vector<6x3xf32>
    %2 = arith.truncf %1 : vector<6x3xf32> to vector<6x3xbf16>
    %c0_2 = arith.constant 0 : index
    %c0_3 = arith.constant 0 : index
    %3 = vector.load %arg3[%c0_2, %c0_3] : memref<3x6xbf16, #tpu.memory_space<vmem>>, vector<3x6xbf16>
    %cst = arith.constant dense<0.000000e+00> : vector<6x6xf32>
    %4 = tpu.matmul %2, %3, %cst {dimension_numbers = #tpu.dot_dimension_numbers<[1], [0], [0], [1], [0, 0, 1, 1], [], []>} : vector<6x3xbf16>, vector<3x6xbf16>, vector<6x6xf32> -> vector<6x6xf32>
    %5 = vector.extract_strided_slice %4 {offsets = [0, 0], sizes = [6, 1], strides = [1, 1]} : vector<6x6xf32> to vector<6x1xf32>
    %6 = arith.truncf %5 : vector<6x1xf32> to vector<6x1xbf16>
    %c0_4 = arith.constant 0 : index
    %c0_5 = arith.constant 0 : index
    %c0_6 = arith.constant 0 : index
    %c0_7 = arith.constant 0 : index
    %7 = vector.load %arg4[%c0_4, %c0_5, %c0_6, %c0_7] : memref<1x2x6x1xbf16, #tpu.memory_space<vmem>>, vector<1x1x6x1xbf16>
    %8 = vector.shape_cast %7 : vector<1x1x6x1xbf16> to vector<6x1xbf16>
    %9 = vector.shape_cast %6 : vector<6x1xbf16> to vector<1x1x6x1xbf16>
    tpu.vector_store %arg4[%c0_4, %c0_5, %c0_6, %c0_7], %9 {strides = array<i32>} : memref<1x2x6x1xbf16, #tpu.memory_space<vmem>>, vector<1x1x6x1xbf16>,
    %10 = vector.extract_strided_slice %4 {offsets = [0, 2], sizes = [6, 1], strides = [1, 1]} : vector<6x6xf32> to vector<6x1xf32>
    %11 = arith.truncf %10 : vector<6x1xf32> to vector<6x1xbf16>
    %c0_8 = arith.constant 0 : index
    %c0_9 = arith.constant 0 : index
    %c0_10 = arith.constant 0 : index
    %c0_11 = arith.constant 0 : index
    %12 = vector.load %arg5[%c0_8, %c0_9, %c0_10, %c0_11] : memref<1x2x6x1xbf16, #tpu.memory_space<vmem>>, vector<1x1x6x1xbf16>
    %13 = vector.shape_cast %12 : vector<1x1x6x1xbf16> to vector<6x1xbf16>
    %14 = vector.shape_cast %11 : vector<6x1xbf16> to vector<1x1x6x1xbf16>
    tpu.vector_store %arg5[%c0_8, %c0_9, %c0_10, %c0_11], %14 {strides = array<i32>} : memref<1x2x6x1xbf16, #tpu.memory_space<vmem>>, vector<1x1x6x1xbf16>,
    %15 = vector.extract_strided_slice %4 {offsets = [0, 4], sizes = [6, 1], strides = [1, 1]} : vector<6x6xf32> to vector<6x1xf32>
    %16 = arith.truncf %15 : vector<6x1xf32> to vector<6x1xbf16>
    %c0_12 = arith.constant 0 : index
    %c0_13 = arith.constant 0 : index
    %c0_14 = arith.constant 0 : index
    %c0_15 = arith.constant 0 : index
    %17 = vector.load %arg6[%c0_12, %c0_13, %c0_14, %c0_15] : memref<1x2x6x1xbf16, #tpu.memory_space<vmem>>, vector<1x1x6x1xbf16>
    %18 = vector.shape_cast %17 : vector<1x1x6x1xbf16> to vector<6x1xbf16>
    %19 = vector.shape_cast %16 : vector<6x1xbf16> to vector<1x1x6x1xbf16>
    tpu.vector_store %arg6[%c0_12, %c0_13, %c0_14, %c0_15], %19 {strides = array<i32>} : memref<1x2x6x1xbf16, #tpu.memory_space<vmem>>, vector<1x1x6x1xbf16>,
    %20 = vector.extract_strided_slice %4 {offsets = [0, 1], sizes = [6, 1], strides = [1, 1]} : vector<6x6xf32> to vector<6x1xf32>
    %21 = arith.truncf %20 : vector<6x1xf32> to vector<6x1xbf16>
    %c0_16 = arith.constant 0 : index
    %c1 = arith.constant 1 : index
    %c0_17 = arith.constant 0 : index
    %c0_18 = arith.constant 0 : index
    %22 = vector.load %arg4[%c0_16, %c1, %c0_17, %c0_18] : memref<1x2x6x1xbf16, #tpu.memory_space<vmem>>, vector<1x1x6x1xbf16>
    %23 = vector.shape_cast %22 : vector<1x1x6x1xbf16> to vector<6x1xbf16>
    %24 = vector.shape_cast %21 : vector<6x1xbf16> to vector<1x1x6x1xbf16>
    tpu.vector_store %arg4[%c0_16, %c1, %c0_17, %c0_18], %24 {strides = array<i32>} : memref<1x2x6x1xbf16, #tpu.memory_space<vmem>>, vector<1x1x6x1xbf16>,
    %25 = vector.extract_strided_slice %4 {offsets = [0, 3], sizes = [6, 1], strides = [1, 1]} : vector<6x6xf32> to vector<6x1xf32>
    %26 = arith.truncf %25 : vector<6x1xf32> to vector<6x1xbf16>
    %c0_19 = arith.constant 0 : index
    %c1_20 = arith.constant 1 : index
    %c0_21 = arith.constant 0 : index
    %c0_22 = arith.constant 0 : index
    %27 = vector.load %arg5[%c0_19, %c1_20, %c0_21, %c0_22] : memref<1x2x6x1xbf16, #tpu.memory_space<vmem>>, vector<1x1x6x1xbf16>
    %28 = vector.shape_cast %27 : vector<1x1x6x1xbf16> to vector<6x1xbf16>
    %29 = vector.shape_cast %26 : vector<6x1xbf16> to vector<1x1x6x1xbf16>
    tpu.vector_store %arg5[%c0_19, %c1_20, %c0_21, %c0_22], %29 {strides = array<i32>} : memref<1x2x6x1xbf16, #tpu.memory_space<vmem>>, vector<1x1x6x1xbf16>,
    %30 = vector.extract_strided_slice %4 {offsets = [0, 5], sizes = [6, 1], strides = [1, 1]} : vector<6x6xf32> to vector<6x1xf32>
    %31 = arith.truncf %30 : vector<6x1xf32> to vector<6x1xbf16>
    %c0_23 = arith.constant 0 : index
    %c1_24 = arith.constant 1 : index
    %c0_25 = arith.constant 0 : index
    %c0_26 = arith.constant 0 : index
    %32 = vector.load %arg6[%c0_23, %c1_24, %c0_25, %c0_26] : memref<1x2x6x1xbf16, #tpu.memory_space<vmem>>, vector<1x1x6x1xbf16>
    %33 = vector.shape_cast %32 : vector<1x1x6x1xbf16> to vector<6x1xbf16>
    %34 = vector.shape_cast %31 : vector<6x1xbf16> to vector<1x1x6x1xbf16>
    tpu.vector_store %arg6[%c0_23, %c1_24, %c0_25, %c0_26], %34 {strides = array<i32>} : memref<1x2x6x1xbf16, #tpu.memory_space<vmem>>, vector<1x1x6x1xbf16>,
    return
  }
  func.func @transform_0(%arg0: i32, %arg1: i32) -> (i32, i32, i32) {
    %c0_i32 = arith.constant 0 : i32
    %c0_i32_0 = arith.constant 0 : i32
    return %arg0, %arg1, %c0_i32 : i32, i32, i32
  }
  func.func @transform_1(%arg0: i32, %arg1: i32) -> (i32, i32) {
    %c0_i32 = arith.constant 0 : i32
    %c0_i32_0 = arith.constant 0 : i32
    %c0_i32_1 = arith.constant 0 : i32
    return %c0_i32, %c0_i32_0 : i32, i32
  }
  func.func @transform_2(%arg0: i32, %arg1: i32) -> (i32, i32, i32, i32) {
    %c0_i32 = arith.constant 0 : i32
    %c0_i32_0 = arith.constant 0 : i32
    %c0_i32_1 = arith.constant 0 : i32
    return %arg0, %c0_i32, %arg1, %c0_i32_0 : i32, i32, i32, i32
  }
  func.func @transform_3(%arg0: i32, %arg1: i32) -> (i32, i32, i32, i32) {
    %c0_i32 = arith.constant 0 : i32
    %c0_i32_0 = arith.constant 0 : i32
    %c0_i32_1 = arith.constant 0 : i32
    return %arg0, %c0_i32, %arg1, %c0_i32_0 : i32, i32, i32, i32
  }
  func.func @transform_4(%arg0: i32, %arg1: i32) -> (i32, i32, i32, i32) {
    %c0_i32 = arith.constant 0 : i32
    %c0_i32_0 = arith.constant 0 : i32
    %c0_i32_1 = arith.constant 0 : i32
    return %arg0, %c0_i32, %arg1, %c0_i32_0 : i32, i32, i32, i32
  }
}

</mosaic_0001>

<llo_original>
// kernel: tpu_custom_call.1
$region0: #{tpu_custom_call.1}
  #allocation0 [shape = 'u32[]', space=smem, size = 0x4, offset = 0x4, fixed_abs, tag = 'smem constant byte address 0x4 - core index']
  #allocation1 [shape = 'u32[144,128]{1,0:T(1,128)}', space=vmem, size = 0x12000, scoped, tag = 'internal scratch']
  %s0 = inlined_call_operand.vmem [shape: f32[2,6,3], index: 0, kind: input, shape index: {}]
  %s1 = inlined_call_operand.vmem [shape: bf16[3,6], index: 1, kind: input, shape index: {}]
  %s2 = inlined_call_operand.vmem [shape: bf16[2,2,6,1], index: 2, kind: output, shape index: {0}]
  %s3 = inlined_call_operand.vmem [shape: bf16[2,2,6,1], index: 3, kind: output, shape index: {1}]
  %s4 = inlined_call_operand.vmem [shape: bf16[2,2,6,1], index: 4, kind: output, shape index: {2}]
  %5 = xla_tuple %s2, %s3, %s4
  %s6 = sld [smem:[#allocation0]]
  $region57: #{tpu_custom_call.1} parent=0
    _
  %s8 = ssub.s32 1, %s6
  %s9 = scalar_select 0, %s8, %s6
  loop: start=0, step=1, limit=4
  $region2: #{tpu_custom_call.1} parent=0 // loop_pre_header
    _
  $region3: #{tpu_custom_call.1} parent=0 // loop_header
    %s11 = sphi 0, %s15
    %p12 = scmp.ge.s32.totalorder %s11, 4
    %s18 = sphi 0, %s30
    %s19 = sphi 0, %s26
    %s20 = sphi 0, %s18
    %s21 = sphi 0, %s19
    %s22 = sphi 0, %s20
    %s23 = sphi 0, %s21
    %s35 = sphi 0, %s37
    %s38 = sphi 0, %s35
    %s39 = sphi 0, %s38
    %s55 = sphi 0, %s39
    %s59 = sphi 0, %s59
    %s61 = sphi 0, %s59
    %s62 = sphi 0, %s61
    %s76 = sphi 0, %s62
    %s84 = sphi 0, %s86
    %s87 = sphi 0, %s84
    %s88 = sphi 0, %s87
    %s104 = sphi 0, %s88
    %s112 = sphi 0, %s114
    %s115 = sphi 0, %s112
    %s116 = sphi 0, %s115
    %s132 = sphi 0, %s116
    %s140 = sphi 0, %s142
    %s143 = sphi 0, %s140
    %s144 = sphi 0, %s143
    %s160 = sphi 0, %s144
  $region4: #{tpu_custom_call.1} parent=0 // loop_header_branch
    %14 = sbr.rel (%p12) target = $region8
  $region5: #{tpu_custom_call.1} parent=0 // loop_body
    %s16 = ssub.s32 %s11, 1
    %s17 = ssub.s32 %s11, 2
    %s24 = sadd.s32 1, %s19
    %p25 = scmp.ge.s32.totalorder %s24, 1
    %s26 = scalar_select %p25, 0, %s24
    %s27 = sadd.s32 1, %s18
    %s28 = scalar_select %p25, %s27, %s18
    %p29 = scmp.ge.s32.totalorder %s28, 2
    %s30 = scalar_select %p29, 0, %s28
    %s31 = ssub.s32 %s18, %s30
    %s32 = ssub.s32 %s19, %s26
    %s33 = sor.u32 %s31, %s32
    %p34 = scmp.eq.s32.totalorder %s33, 0
    %s36 = sadd.s32 %s35, 1
    %s37 = scalar_select %p34, %s35, %s36
    %p40 = pneg %p34
    %p41 = scmp.eq.s32.totalorder %s11, 1
    %p42 = por %p40, %p41
    %p43 = scmp.ne.s32.totalorder %s35, %s38
    %p44 = scmp.eq.s32.totalorder %s11, 0
    %p45 = por %p43, %p44
    %p46 = scmp.ne.s32.totalorder %s35, %s38
    %p47 = scmp.eq.s32.totalorder %s16, 1
    %p48 = por %p46, %p47
    %p49 = scmp.ne.s32.totalorder %s38, %s39
    %p50 = scmp.eq.s32.totalorder %s16, 0
    %p51 = por %p49, %p50
    %p52 = scmp.ne.s32.totalorder %s38, %s39
    %p53 = scmp.eq.s32.totalorder %s17, 1
    %p54 = por %p52, %p53
    %p56 = scmp.ne.s32.totalorder %s39, %s55
    %p57 = scmp.eq.s32.totalorder %s17, 0
    %p58 = por %p56, %p57
    %s60 = sadd.s32 %s59, 1
    %p63 = scmp.eq.s32.totalorder %s11, 1
    %p64 = scmp.ne.s32.totalorder %s59, %s61
    %p65 = scmp.eq.s32.totalorder %s11, 0
    %p66 = por %p64, %p65
    %p67 = scmp.ne.s32.totalorder %s59, %s61
    %p68 = scmp.eq.s32.totalorder %s16, 1
    %p69 = por %p67, %p68
    %p70 = scmp.ne.s32.totalorder %s61, %s62
    %p71 = scmp.eq.s32.totalorder %s16, 0
    %p72 = por %p70, %p71
    %p73 = scmp.ne.s32.totalorder %s61, %s62
    %p74 = scmp.eq.s32.totalorder %s17, 1
    %p75 = por %p73, %p74
    %p77 = scmp.ne.s32.totalorder %s62, %s76
    %p78 = scmp.eq.s32.totalorder %s17, 0
    %p79 = por %p77, %p78
    %s80 = ssub.s32 %s18, %s30
    %s81 = ssub.s32 %s19, %s26
    %s82 = sor.u32 %s80, %s81
    %p83 = scmp.eq.s32.totalorder %s82, 0
    %s85 = sadd.s32 %s84, 1
    %s86 = scalar_select %p83, %s84, %s85
    %p89 = pneg %p83
    %p90 = scmp.eq.s32.totalorder %s11, 1
    %p91 = por %p89, %p90
    %p92 = scmp.ne.s32.totalorder %s84, %s87
    %p93 = scmp.eq.s32.totalorder %s11, 0
    %p94 = por %p92, %p93
    %p95 = scmp.ne.s32.totalorder %s84, %s87
    %p96 = scmp.eq.s32.totalorder %s16, 1
    %p97 = por %p95, %p96
    %p98 = scmp.ne.s32.totalorder %s87, %s88
    %p99 = scmp.eq.s32.totalorder %s16, 0
    %p100 = por %p98, %p99
    %p101 = scmp.ne.s32.totalorder %s87, %s88
    %p102 = scmp.eq.s32.totalorder %s17, 1
    %p103 = por %p101, %p102
    %p105 = scmp.ne.s32.totalorder %s88, %s104
    %p106 = scmp.eq.s32.totalorder %s17, 0
    %p107 = por %p105, %p106
    %s108 = ssub.s32 %s18, %s30
    %s109 = ssub.s32 %s19, %s26
    %s110 = sor.u32 %s108, %s109
    %p111 = scmp.eq.s32.totalorder %s110, 0
    %s113 = sadd.s32 %s112, 1
    %s114 = scalar_select %p111, %s112, %s113
    %p117 = pneg %p111
    %p118 = scmp.eq.s32.totalorder %s11, 1
    %p119 = por %p117, %p118
    %p120 = scmp.ne.s32.totalorder %s112, %s115
    %p121 = scmp.eq.s32.totalorder %s11, 0
    %p122 = por %p120, %p121
    %p123 = scmp.ne.s32.totalorder %s112, %s115
    %p124 = scmp.eq.s32.totalorder %s16, 1
    %p125 = por %p123, %p124
    %p126 = scmp.ne.s32.totalorder %s115, %s116
    %p127 = scmp.eq.s32.totalorder %s16, 0
    %p128 = por %p126, %p127
    %p129 = scmp.ne.s32.totalorder %s115, %s116
    %p130 = scmp.eq.s32.totalorder %s17, 1
    %p131 = por %p129, %p130
    %p133 = scmp.ne.s32.totalorder %s116, %s132
    %p134 = scmp.eq.s32.totalorder %s17, 0
    %p135 = por %p133, %p134
    %s136 = ssub.s32 %s18, %s30
    %s137 = ssub.s32 %s19, %s26
    %s138 = sor.u32 %s136, %s137
    %p139 = scmp.eq.s32.totalorder %s138, 0
    %s141 = sadd.s32 %s140, 1
    %s142 = scalar_select %p139, %s140, %s141
    %p145 = pneg %p139
    %p146 = scmp.eq.s32.totalorder %s11, 1
    %p147 = por %p145, %p146
    %p148 = scmp.ne.s32.totalorder %s140, %s143
    %p149 = scmp.eq.s32.totalorder %s11, 0
    %p150 = por %p148, %p149
    %p151 = scmp.ne.s32.totalorder %s140, %s143
    %p152 = scmp.eq.s32.totalorder %s16, 1
    %p153 = por %p151, %p152
    %p154 = scmp.ne.s32.totalorder %s143, %s144
    %p155 = scmp.eq.s32.totalorder %s16, 0
    %p156 = por %p154, %p155
    %p157 = scmp.ne.s32.totalorder %s143, %s144
    %p158 = scmp.eq.s32.totalorder %s17, 1
    %p159 = por %p157, %p158
    %p161 = scmp.ne.s32.totalorder %s144, %s160
    %p162 = scmp.eq.s32.totalorder %s17, 0
    %p163 = por %p161, %p162
    %p164 = scmp.le.s32.totalorder 1, %s11
    %p165 = scmp.lt.s32.totalorder %s11, 3
    %p166 = pnand %p164, %p165
    %p167 = pneg %p166
    // Predicated region
    $region9: #{tpu_custom_call.1} parent=5 // pred_check
      _
    $region10: #{tpu_custom_call.1} parent=5 // pred_check_branch
      %169 = sbr.rel (%p166) target = $region12
    $region11: #{tpu_custom_call.1} parent=5 // pred_region
      %s170 = ssub.s32 %s11, 1
      // Predicated region
      $region13: #{tpu_custom_call.1} parent=11 // pred_check
        %p171 = pneg %p72
      $region14: #{tpu_custom_call.1} parent=11 // pred_check_branch
        %173 = sbr.rel (%p171) target = $region16
      $region15: #{tpu_custom_call.1} parent=11 // pred_region
        _
      $region16: #{tpu_custom_call.1} parent=11 // pred_fallthru
        _
    $region12: #{tpu_custom_call.1} parent=5 // pred_fallthru
      _
    %p174 = scmp.lt.s32.totalorder %s11, 2
    // Predicated region
    $region17: #{tpu_custom_call.1} parent=5 // pred_check
      %p175 = pneg %p174
    $region18: #{tpu_custom_call.1} parent=5 // pred_check_branch
      %177 = sbr.rel (%p175) target = $region20
    $region19: #{tpu_custom_call.1} parent=5 // pred_region
      // Predicated region
      $region21: #{tpu_custom_call.1} parent=19 // pred_check
        %p178 = pneg %p45
      $region22: #{tpu_custom_call.1} parent=19 // pred_check_branch
        %180 = sbr.rel (%p178) target = $region24
      $region23: #{tpu_custom_call.1} parent=19 // pred_region
        %p181 = scmp.lt.s32.totalorder %s18, 1
        %s182 = scalar_select %p181, %s18, 1
        %p183 = scmp.lt.s32.totalorder %s19, 0
        %s184 = scalar_select %p183, %s19, 0
        %s185 = sadd.s32 %s184, %s182
        %s186 = smul.addr %s185, 8
        %s187 = scalar_lea.vmem %s0, %s186
      $region24: #{tpu_custom_call.1} parent=19 // pred_fallthru
        _
    $region20: #{tpu_custom_call.1} parent=5 // pred_fallthru
      _
    %p188 = scmp.le.s32.totalorder 1, %s11
    %p189 = scmp.lt.s32.totalorder %s11, 3
    %p190 = pnand %p188, %p189
    %p191 = pneg %p190
    // Predicated region
    $region25: #{tpu_custom_call.1} parent=5 // pred_check
      _
    $region26: #{tpu_custom_call.1} parent=5 // pred_check_branch
      %193 = sbr.rel (%p190) target = $region28
    $region27: #{tpu_custom_call.1} parent=5 // pred_region
      %s194 = ssub.s32 %s11, 1
      %p195 = scmp.lt.s32.totalorder %s20, 1
      %s196 = scalar_select %p195, %s20, 1
      %p197 = scmp.lt.s32.totalorder %s21, 0
      %s198 = scalar_select %p197, %s21, 0
      %s199 = sadd.s32 %s198, %s196
      %s200 = smul.addr %s199, 8
      %s201 = scalar_lea.vmem %s0, %s200
      %p202 = pneg %p51
      %p203 = pneg %p48
      %p204 = pneg %p72
      %p205 = pneg %p69
      %p206 = pneg %p100
      %p207 = pneg %p97
      %p208 = scmp.lt.s32.totalorder %s20, 1
      %s209 = scalar_select %p208, %s20, 1
      %p210 = scmp.lt.s32.totalorder %s21, 0
      %s211 = scalar_select %p210, %s21, 0
      %s212 = smul.addr %s209, 2
      %s213 = sadd.s32 %s211, %s212
      %s214 = smul.addr %s213, 4
      %s215 = scalar_lea.vmem %s2, %s214
      %p216 = pneg %p128
      %p217 = pneg %p125
      %p218 = scmp.lt.s32.totalorder %s20, 1
      %s219 = scalar_select %p218, %s20, 1
      %p220 = scmp.lt.s32.totalorder %s21, 0
      %s221 = scalar_select %p220, %s21, 0
      %s222 = smul.addr %s219, 2
      %s223 = sadd.s32 %s221, %s222
      %s224 = smul.addr %s223, 4
      %s225 = scalar_lea.vmem %s3, %s224
      %p226 = pneg %p156
      %p227 = pneg %p153
      %p228 = scmp.lt.s32.totalorder %s20, 1
      %s229 = scalar_select %p228, %s20, 1
      %p230 = scmp.lt.s32.totalorder %s21, 0
      %s231 = scalar_select %p230, %s21, 0
      %s232 = smul.addr %s229, 2
      %s233 = sadd.s32 %s231, %s232
      %s234 = smul.addr %s233, 4
      %s235 = scalar_lea.vmem %s4, %s234
      %p236 = scmp.lt.s32.totalorder %s20, 1
      %s237 = scalar_select %p236, %s20, 1
      %p238 = scmp.lt.s32.totalorder %s21, 0
      %s239 = scalar_select %p238, %s21, 0
      %s240 = sadd.s32 %s239, %s237
      %s241 = smul.addr %s240, 8
      %s242 = scalar_lea.vmem %s0, %s241
      %p243 = scmp.lt.s32.totalorder %s20, 1
      %s244 = scalar_select %p243, %s20, 1
      %p245 = scmp.lt.s32.totalorder %s21, 0
      %s246 = scalar_select %p245, %s21, 0
      %s247 = smul.addr %s244, 2
      %s248 = sadd.s32 %s246, %s247
      %s249 = smul.addr %s248, 4
      %s250 = scalar_lea.vmem %s2, %s249
      %p251 = scmp.lt.s32.totalorder %s20, 1
      %s252 = scalar_select %p251, %s20, 1
      %p253 = scmp.lt.s32.totalorder %s21, 0
      %s254 = scalar_select %p253, %s21, 0
      %s255 = smul.addr %s252, 2
      %s256 = sadd.s32 %s254, %s255
      %s257 = smul.addr %s256, 4
      %s258 = scalar_lea.vmem %s3, %s257
      %p259 = scmp.lt.s32.totalorder %s20, 1
      %s260 = scalar_select %p259, %s20, 1
      %p261 = scmp.lt.s32.totalorder %s21, 0
      %s262 = scalar_select %p261, %s21, 0
      %s263 = smul.addr %s260, 2
      %s264 = sadd.s32 %s262, %s263
      %s265 = smul.addr %s264, 4
      %s266 = scalar_lea.vmem %s4, %s265
      %v268 = vld [vmem:[%s242] sm:$0x3f]
      %v269 = vpack.c.bf16 %v268, %v268
      %v270 = vld [vmem:[%s1] sm:$0x3]
      %vm271 = vcmask 23552
      %v273 = vsel %vm271, %v269, 0
      %vm275 = vcmask 1040384
      %vm276 = vcmask 1041408
      %v277 = vsel %vm275, 4294967295, 65535
      %v278 = vsel %vm276, %v277, 0
      %v280 = vand.u32 %v270, %v278
      %282 = vmatprep.subr.bf16.mxu0 0
      %283 = vmatpush1.bf16.msra.mxu0 0
      %284 = vmatprep.subr.bf16.mxu0 0
      %285 = vmatpush1.bf16.msra.mxu0 0
      %286 = vmatprep.subr.bf16.mxu0 0
      %287 = vmatpush1.bf16.msra.mxu0 0
      %288 = vmatprep.subr.bf16.mxu0 0
      %289 = vmatpush1.bf16.msra.mxu0 0
      %290 = vmatprep.subr.bf16.mxu0 0
      %291 = vmatpush1.bf16.msra.mxu0 0
      %292 = vmatprep.subr.bf16.mxu0 0
      %293 = vmatpush1.bf16.msra.mxu0 0
      %294 = vmatprep.subr.bf16.mxu0 0
      %295 = vmatpush1.bf16.msra.mxu0 0
      %296 = vmatprep.subr.bf16.mxu0 0
      %297 = vmatpush1.bf16.msra.mxu0 %v280
      %298 = vmatprep.subr.bf16.mxu0 0
      %299 = vmatpush2.bf16.msra.mxu0 0
      %300 = vmatprep.subr.bf16.mxu0 0
      %301 = vmatpush2.bf16.msra.mxu0 0
      %302 = vmatprep.subr.bf16.mxu0 0
      %303 = vmatpush2.bf16.msra.mxu0 0
      %304 = vmatprep.subr.bf16.mxu0 0
      %305 = vmatpush2.bf16.msra.mxu0 0
      %306 = vmatprep.subr.bf16.mxu0 0
      %307 = vmatpush2.bf16.msra.mxu0 0
      %308 = vmatprep.subr.bf16.mxu0 0
      %309 = vmatpush2.bf16.msra.mxu0 0
      %310 = vmatprep.subr.bf16.mxu0 0
      %311 = vmatpush2.bf16.msra.mxu0 0
      %312 = vmatprep.subr.bf16.mxu0 0
      %313 = vmatpush2.bf16.msra.mxu0 0
      %314 = vmatprep.mubr.bf16.mxu0 0
      %315 = vmatmul.mubr.bf16.gmra.mxu0 %v273
      %v316 = vpop.f32.mrf.mxu0
      %v317 = vadd.f32 0.0, %v316
      %v318 = vpop.f32.mrf.mxu0
      %v319 = vpop.f32.mrf.mxu0
      %v320 = vpop.f32.mrf.mxu0
      %321 = vdwg.mxu0
      %v322 = vpack.c.bf16 %v317, %v317
      %vm323 = vcmask 2048
      %324 = vst.msk [vmem:[%s250] sm:$0x7] %vm323, %v322
      %v326 = vunpack.c.l.b16 %v322
      %v327 = vpack.c.b16 %v326, %v326
      %328 = vrot.lane.b32.xlu0 %v327, 126
      %v329 = vpop.permute.xlu0 %328
      %331 = vst.msk [vmem:[%s258] sm:$0x7] %vm323, %v329
      %332 = vrot.lane.b32.xlu0 %v327, 124
      %v333 = vpop.permute.xlu0 %332
      %335 = vst.msk [vmem:[%s266] sm:$0x7] %vm323, %v333
      %336 = vrot.lane.b32.xlu0 %v327, 127
      %v337 = vpop.permute.xlu0 %336
      %s339 = scalar_lea.vmem %s250, 4
      %340 = vst.msk [vmem:[%s339] sm:$0x7] %vm323, %v337
      %341 = vrot.lane.b32.xlu0 %v327, 125
      %v342 = vpop.permute.xlu0 %341
      %s344 = scalar_lea.vmem %s258, 4
      %345 = vst.msk [vmem:[%s344] sm:$0x7] %vm323, %v342
      %346 = vrot.lane.b32.xlu0 %v327, 123
      %v347 = vpop.permute.xlu0 %346
      %s349 = scalar_lea.vmem %s266, 4
      %350 = vst.msk [vmem:[%s349] sm:$0x7] %vm323, %v347
      %p351 = scmp.lt.s32.totalorder %s20, 1
      %s352 = scalar_select %p351, %s20, 1
      %p353 = scmp.lt.s32.totalorder %s21, 0
      %s354 = scalar_select %p353, %s21, 0
      %s355 = smul.addr %s352, 2
      %s356 = sadd.s32 %s354, %s355
      %s357 = smul.addr %s356, 4
      %s358 = scalar_lea.vmem %s2, %s357
      %p359 = scmp.lt.s32.totalorder %s20, 1
      %s360 = scalar_select %p359, %s20, 1
      %p361 = scmp.lt.s32.totalorder %s21, 0
      %s362 = scalar_select %p361, %s21, 0
      %s363 = smul.addr %s360, 2
      %s364 = sadd.s32 %s362, %s363
      %s365 = smul.addr %s364, 4
      %s366 = scalar_lea.vmem %s3, %s365
      %p367 = scmp.lt.s32.totalorder %s20, 1
      %s368 = scalar_select %p367, %s20, 1
      %p369 = scmp.lt.s32.totalorder %s21, 0
      %s370 = scalar_select %p369, %s21, 0
      %s371 = smul.addr %s368, 2
      %s372 = sadd.s32 %s370, %s371
      %s373 = smul.addr %s372, 4
      %s374 = scalar_lea.vmem %s4, %s373
      // Predicated region
      $region29: #{tpu_custom_call.1} parent=27 // pred_check
        %p375 = pneg %p97
      $region30: #{tpu_custom_call.1} parent=27 // pred_check_branch
        %377 = sbr.rel (%p375) target = $region32
      $region31: #{tpu_custom_call.1} parent=27 // pred_region
        _
      $region32: #{tpu_custom_call.1} parent=27 // pred_fallthru
        _
      // Predicated region
      $region33: #{tpu_custom_call.1} parent=27 // pred_check
        %p378 = pneg %p125
      $region34: #{tpu_custom_call.1} parent=27 // pred_check_branch
        %380 = sbr.rel (%p378) target = $region36
      $region35: #{tpu_custom_call.1} parent=27 // pred_region
        _
      $region36: #{tpu_custom_call.1} parent=27 // pred_fallthru
        _
      // Predicated region
      $region37: #{tpu_custom_call.1} parent=27 // pred_check
        %p381 = pneg %p153
      $region38: #{tpu_custom_call.1} parent=27 // pred_check_branch
        %383 = sbr.rel (%p381) target = $region40
      $region39: #{tpu_custom_call.1} parent=27 // pred_region
        _
      $region40: #{tpu_custom_call.1} parent=27 // pred_fallthru
        _
    $region28: #{tpu_custom_call.1} parent=5 // pred_fallthru
      _
    %p384 = scmp.le.s32.totalorder 2, %s11
    // Predicated region
    $region41: #{tpu_custom_call.1} parent=5 // pred_check
      %p385 = pneg %p384
    $region42: #{tpu_custom_call.1} parent=5 // pred_check_branch
      %387 = sbr.rel (%p385) target = $region44
    $region43: #{tpu_custom_call.1} parent=5 // pred_region
      %s388 = ssub.s32 %s11, 2
      // Predicated region
      $region45: #{tpu_custom_call.1} parent=43 // pred_check
        %p389 = pneg %p103
      $region46: #{tpu_custom_call.1} parent=43 // pred_check_branch
        %391 = sbr.rel (%p389) target = $region48
      $region47: #{tpu_custom_call.1} parent=43 // pred_region
        %p392 = scmp.lt.s32.totalorder %s22, 1
        %s393 = scalar_select %p392, %s22, 1
        %p394 = scmp.lt.s32.totalorder %s23, 0
        %s395 = scalar_select %p394, %s23, 0
        %s396 = smul.addr %s393, 2
        %s397 = sadd.s32 %s395, %s396
        %s398 = smul.addr %s397, 4
        %s399 = scalar_lea.vmem %s2, %s398
      $region48: #{tpu_custom_call.1} parent=43 // pred_fallthru
        _
      // Predicated region
      $region49: #{tpu_custom_call.1} parent=43 // pred_check
        %p400 = pneg %p131
      $region50: #{tpu_custom_call.1} parent=43 // pred_check_branch
        %402 = sbr.rel (%p400) target = $region52
      $region51: #{tpu_custom_call.1} parent=43 // pred_region
        %p403 = scmp.lt.s32.totalorder %s22, 1
        %s404 = scalar_select %p403, %s22, 1
        %p405 = scmp.lt.s32.totalorder %s23, 0
        %s406 = scalar_select %p405, %s23, 0
        %s407 = smul.addr %s404, 2
        %s408 = sadd.s32 %s406, %s407
        %s409 = smul.addr %s408, 4
        %s410 = scalar_lea.vmem %s3, %s409
      $region52: #{tpu_custom_call.1} parent=43 // pred_fallthru
        _
      // Predicated region
      $region53: #{tpu_custom_call.1} parent=43 // pred_check
        %p411 = pneg %p159
      $region54: #{tpu_custom_call.1} parent=43 // pred_check_branch
        %413 = sbr.rel (%p411) target = $region56
      $region55: #{tpu_custom_call.1} parent=43 // pred_region
        %p414 = scmp.lt.s32.totalorder %s22, 1
        %s415 = scalar_select %p414, %s22, 1
        %p416 = scmp.lt.s32.totalorder %s23, 0
        %s417 = scalar_select %p416, %s23, 0
        %s418 = smul.addr %s415, 2
        %s419 = sadd.s32 %s417, %s418
        %s420 = smul.addr %s419, 4
        %s421 = scalar_lea.vmem %s4, %s420
      $region56: #{tpu_custom_call.1} parent=43 // pred_fallthru
        _
    $region44: #{tpu_custom_call.1} parent=5 // pred_fallthru
      _
  $region6: #{tpu_custom_call.1} parent=0 // loop_footer
    %s15 = sadd.s32 1, %s11
  $region7: #{tpu_custom_call.1} parent=0 // loop_footer_branch
    %10 = sbr.rel target = $region3
  $region8: #{tpu_custom_call.1} parent=0 // loop_exit
    _

</llo_original>
